<compile_context>
chip_gen: v6e
topology: v6e:2x2x1
jax: 0.10.0
libtpu: 0.0.40
codegen_flags: <defaults>
</compile_context>

<pallas_src>
import jax
import jax.numpy as jnp
from jax.experimental import pallas as pl
from jax.experimental.pallas import tpu as pltpu


def reward_predictor_kernel(x_ref, w1_ref, b1_ref, w2_ref, b2_ref,
                            w3_ref, b3_ref, o_ref):
    x = x_ref[...]                                                 # (D, TB)
    # Layer 1: (64, D) @ (D, TB) -> (64, TB); MXU, f32 accumulate.
    h1 = jnp.dot(w1_ref[...], x, preferred_element_type=jnp.float32) + b1_ref[...]
    h1 = jnp.maximum(h1, 0.0).astype(x.dtype)                      # back to compute dtype
    # Layer 2: (32, 64) @ (64, TB) -> (32, TB); MXU, f32 accumulate.
    h2 = jnp.dot(w2_ref[...], h1, preferred_element_type=jnp.float32) + b2_ref[...]
    h2 = jnp.maximum(h2, 0.0)                                      # f32 (VPU path)
    # Layer 3: K=32, N=1 -> VPU multiply + XLU sublane reduce (skip the MXU).
    w3_col = w3_ref[...]                                           # (32, 1) f32
    out = jnp.sum(h2 * w3_col, axis=0, keepdims=True) + b3_ref[...]  # (1, TB)
    o_ref[...] = out.astype(o_ref.dtype)


def reward_predictor(x, params, *, tile_b=None, compute_dtype=jnp.bfloat16):
    """x: (B, obs_size + act_size) float32. Returns (B, 1) float32.

    tile_b is the batch tile on the 128-lane axis (multiple of 128). For large
    batches sweep 512-2048; default picks 128 for small B, 512 otherwise.
    """
    w1, b1, w2, b2, w3, b3 = params
    B, D = x.shape

    if tile_b is None:
        tile_b = 512 if B >= 1024 else 128
    assert tile_b % 128 == 0, "batch tile sits on the lane axis -> multiple of 128"

    # Pad batch to a multiple of tile_b; transpose so batch is lane-dense.
    Bp = ((B + tile_b - 1) // tile_b) * tile_b
    xT = x.T                                                       # (D, B)
    if Bp != B:
        xT = jnp.pad(xT, ((0, 0), (0, Bp - B)))
    xT = xT.astype(compute_dtype)
    w1c = w1.astype(compute_dtype)                                 # (64, D)
    w2c = w2.astype(compute_dtype)                                 # (32, 64)
    w3_col = w3.T.astype(jnp.float32)                              # (32, 1)
    b1f = b1.astype(jnp.float32)                                   # (64, 1)
    b2f = b2.astype(jnp.float32)                                   # (32, 1)
    b3f = b3.astype(jnp.float32)                                   # (1, 1)

    grid = (Bp // tile_b,)

    # Weights / biases: full-array constant-index blocks, resident every step.
    full = lambda a: pl.BlockSpec(a.shape, lambda i: (0,) * a.ndim)

    outT = pl.pallas_call(
        reward_predictor_kernel,
        out_shape=jax.ShapeDtypeStruct((1, Bp), jnp.float32),
        grid_spec=pltpu.PrefetchScalarGridSpec(
            num_scalar_prefetch=0,
            grid=grid,
            in_specs=[
                pl.BlockSpec((D, tile_b), lambda i: (0, i)),       # x tile, lane-dense
                full(w1c), full(b1f),
                full(w2c), full(b2f),
                full(w3_col), full(b3f),
            ],
            out_specs=pl.BlockSpec((1, tile_b), lambda i: (0, i)),  # lane-dense output
        ),
        compiler_params=pltpu.CompilerParams(
            dimension_semantics=("parallel",)),                     # megacore sharding
    )(xT, w1c, b1f, w2c, b2f, w3_col, b3f)

    return outT[:, :B].T                                           # (B, 1)


def init_params(key, obs_size, act_size):
    """Deterministic init matching nn.Linear shapes ([out, in] weights, (out,1) biases)."""
    d_in = obs_size + act_size
    dims = [(64, d_in), (32, 64), (1, 32)]
    params = []
    for fan_out, fan_in in dims:
        key, kw, kb = jax.random.split(key, 3)
        bound = 1.0 / jnp.sqrt(fan_in)
        w = jax.random.uniform(kw, (fan_out, fan_in), jnp.float32, -bound, bound)
        b = jax.random.uniform(kb, (fan_out, 1), jnp.float32, -bound, bound)
        params += [w, b]
    return tuple(params)


def reward_predictor_ref(x, params):
    w1, b1, w2, b2, w3, b3 = params
    h1 = jnp.maximum(x @ w1.T + b1.T, 0.0)
    h2 = jnp.maximum(h1 @ w2.T + b2.T, 0.0)
    return h2 @ w3.T + b3.T


if __name__ == "__main__":
    obs_size, act_size, batch = 24, 8, 256
    key = jax.random.PRNGKey(0)
    key, kx = jax.random.split(key)
    x = jax.random.normal(kx, (batch, obs_size + act_size), jnp.float32)
    params = init_params(key, obs_size, act_size)

    ref = reward_predictor_ref(x, params)

    # Exact-path check (f32 compute) -- tight tolerance.
    out_f32 = jax.block_until_ready(
        reward_predictor(x, params, compute_dtype=jnp.float32))
    assert out_f32.shape == (batch, 1)
    assert jnp.allclose(out_f32, ref, atol=1e-5, rtol=1e-5)

    # Fast path (bf16 MXU inputs, f32 accumulation) -- bf16-level tolerance.
    out_bf16 = jax.block_until_ready(reward_predictor(x, params))
    assert out_bf16.shape == (batch, 1)
    assert jnp.allclose(out_bf16, ref, atol=5e-2, rtol=5e-2)

    print("KERNEL_OK")
</pallas_src>

<mosaic_0001>
module attributes {stable_mosaic.version = 11 : i64} {
  func.func @reward_predictor_kernel(%arg0: i32, %arg1: memref<32x128xf32, #tpu.memory_space<vmem>>, %arg2: memref<64x32xf32, #tpu.memory_space<vmem>>, %arg3: memref<64x1xf32, #tpu.memory_space<vmem>>, %arg4: memref<32x64xf32, #tpu.memory_space<vmem>>, %arg5: memref<32x1xf32, #tpu.memory_space<vmem>>, %arg6: memref<32x1xf32, #tpu.memory_space<vmem>>, %arg7: memref<1x1xf32, #tpu.memory_space<vmem>>, %arg8: memref<1x128xf32, #tpu.memory_space<vmem>>) attributes {dimension_semantics = [#tpu.dimension_semantics<parallel>], iteration_bounds = array<i64: 2>, scalar_prefetch = 0 : i64, scratch_operands = 0 : i64, tpu.core_type = #tpu.core_type<tc>, window_params = [{transform_indices = @transform_0, window_bounds = array<i64: 32, 128>}, {pipeline_mode = #tpu.pipeline_mode<synchronous>, transform_indices = @transform_1, window_bounds = array<i64: 64, 32>}, {pipeline_mode = #tpu.pipeline_mode<synchronous>, transform_indices = @transform_2, window_bounds = array<i64: 64, 1>}, {pipeline_mode = #tpu.pipeline_mode<synchronous>, transform_indices = @transform_3, window_bounds = array<i64: 32, 64>}, {pipeline_mode = #tpu.pipeline_mode<synchronous>, transform_indices = @transform_4, window_bounds = array<i64: 32, 1>}, {pipeline_mode = #tpu.pipeline_mode<synchronous>, transform_indices = @transform_5, window_bounds = array<i64: 32, 1>}, {pipeline_mode = #tpu.pipeline_mode<synchronous>, transform_indices = @transform_6, window_bounds = array<i64: 1, 1>}, {transform_indices = @transform_7, window_bounds = array<i64: 1, 128>}]} {
    %c0 = arith.constant 0 : index
    %c0_0 = arith.constant 0 : index
    %0 = vector.load %arg1[%c0, %c0_0] : memref<32x128xf32, #tpu.memory_space<vmem>>, vector<32x128xf32>
    %c0_1 = arith.constant 0 : index
    %c0_2 = arith.constant 0 : index
    %1 = vector.load %arg2[%c0_1, %c0_2] : memref<64x32xf32, #tpu.memory_space<vmem>>, vector<64x32xf32>
    %cst = arith.constant dense<0.000000e+00> : vector<64x128xf32>
    %2 = tpu.matmul %1, %0, %cst {dimension_numbers = #tpu.dot_dimension_numbers<[1], [0], [0], [1], [0, 0, 1, 1], [], []>} : vector<64x32xf32>, vector<32x128xf32>, vector<64x128xf32> -> vector<64x128xf32>
    %c0_3 = arith.constant 0 : index
    %c0_4 = arith.constant 0 : index
    %3 = vector.load %arg3[%c0_3, %c0_4] : memref<64x1xf32, #tpu.memory_space<vmem>>, vector<64x1xf32>
    %4 = vector.broadcast %3 : vector<64x1xf32> to vector<64x128xf32>
    %5 = arith.addf %2, %4 : vector<64x128xf32>
    %cst_5 = arith.constant 0.000000e+00 : f32
    %6 = vector.broadcast %cst_5 : f32 to vector<64x128xf32>
    %7 = arith.maximumf %5, %6 : vector<64x128xf32>
    %c0_6 = arith.constant 0 : index
    %c0_7 = arith.constant 0 : index
    %8 = vector.load %arg4[%c0_6, %c0_7] : memref<32x64xf32, #tpu.memory_space<vmem>>, vector<32x64xf32>
    %cst_8 = arith.constant dense<0.000000e+00> : vector<32x128xf32>
    %9 = tpu.matmul %8, %7, %cst_8 {dimension_numbers = #tpu.dot_dimension_numbers<[1], [0], [0], [1], [0, 0, 1, 1], [], []>} : vector<32x64xf32>, vector<64x128xf32>, vector<32x128xf32> -> vector<32x128xf32>
    %c0_9 = arith.constant 0 : index
    %c0_10 = arith.constant 0 : index
    %10 = vector.load %arg5[%c0_9, %c0_10] : memref<32x1xf32, #tpu.memory_space<vmem>>, vector<32x1xf32>
    %11 = vector.broadcast %10 : vector<32x1xf32> to vector<32x128xf32>
    %12 = arith.addf %9, %11 : vector<32x128xf32>
    %cst_11 = arith.constant 0.000000e+00 : f32
    %13 = vector.broadcast %cst_11 : f32 to vector<32x128xf32>
    %14 = arith.maximumf %12, %13 : vector<32x128xf32>
    %c0_12 = arith.constant 0 : index
    %c0_13 = arith.constant 0 : index
    %15 = vector.load %arg6[%c0_12, %c0_13] : memref<32x1xf32, #tpu.memory_space<vmem>>, vector<32x1xf32>
    %16 = vector.broadcast %15 : vector<32x1xf32> to vector<32x128xf32>
    %17 = arith.mulf %14, %16 : vector<32x128xf32>
    %cst_14 = arith.constant dense<0.000000e+00> : vector<128xf32>
    %18 = vector.multi_reduction <add>, %17, %cst_14 [0] : vector<32x128xf32> to vector<128xf32>
    %19 = vector.shape_cast %18 : vector<128xf32> to vector<1x128xf32>
    %c0_15 = arith.constant 0 : index
    %c0_16 = arith.constant 0 : index
    %20 = vector.load %arg7[%c0_15, %c0_16] : memref<1x1xf32, #tpu.memory_space<vmem>>, vector<1x1xf32>
    %21 = vector.broadcast %20 : vector<1x1xf32> to vector<1x128xf32>
    %22 = arith.addf %19, %21 : vector<1x128xf32>
    %c0_17 = arith.constant 0 : index
    %c0_18 = arith.constant 0 : index
    %23 = vector.load %arg8[%c0_17, %c0_18] : memref<1x128xf32, #tpu.memory_space<vmem>>, vector<1x128xf32>
    tpu.vector_store %arg8[%c0_17, %c0_18], %22 {strides = array<i32>} : memref<1x128xf32, #tpu.memory_space<vmem>>, vector<1x128xf32>,
    return
  }
  func.func @transform_0(%arg0: i32) -> (i32, i32) {
    %c0_i32 = arith.constant 0 : i32
    %c0_i32_0 = arith.constant 0 : i32
    return %c0_i32, %arg0 : i32, i32
  }
  func.func @transform_1(%arg0: i32) -> (i32, i32) {
    %c0_i32 = arith.constant 0 : i32
    %c0_i32_0 = arith.constant 0 : i32
    %c0_i32_1 = arith.constant 0 : i32
    return %c0_i32, %c0_i32_0 : i32, i32
  }
  func.func @transform_2(%arg0: i32) -> (i32, i32) {
    %c0_i32 = arith.constant 0 : i32
    %c0_i32_0 = arith.constant 0 : i32
    %c0_i32_1 = arith.constant 0 : i32
    return %c0_i32, %c0_i32_0 : i32, i32
  }
  func.func @transform_3(%arg0: i32) -> (i32, i32) {
    %c0_i32 = arith.constant 0 : i32
    %c0_i32_0 = arith.constant 0 : i32
    %c0_i32_1 = arith.constant 0 : i32
    return %c0_i32, %c0_i32_0 : i32, i32
  }
  func.func @transform_4(%arg0: i32) -> (i32, i32) {
    %c0_i32 = arith.constant 0 : i32
    %c0_i32_0 = arith.constant 0 : i32
    %c0_i32_1 = arith.constant 0 : i32
    return %c0_i32, %c0_i32_0 : i32, i32
  }
  func.func @transform_5(%arg0: i32) -> (i32, i32) {
    %c0_i32 = arith.constant 0 : i32
    %c0_i32_0 = arith.constant 0 : i32
    %c0_i32_1 = arith.constant 0 : i32
    return %c0_i32, %c0_i32_0 : i32, i32
  }
  func.func @transform_6(%arg0: i32) -> (i32, i32) {
    %c0_i32 = arith.constant 0 : i32
    %c0_i32_0 = arith.constant 0 : i32
    %c0_i32_1 = arith.constant 0 : i32
    return %c0_i32, %c0_i32_0 : i32, i32
  }
  func.func @transform_7(%arg0: i32) -> (i32, i32) {
    %c0_i32 = arith.constant 0 : i32
    %c0_i32_0 = arith.constant 0 : i32
    return %c0_i32, %arg0 : i32, i32
  }
}

</mosaic_0001>

<llo_original>
// kernel: tpu_custom_call.1
$region0: #{tpu_custom_call.1}
  #allocation0 [shape = 'u32[]', space=smem, size = 0x4, offset = 0x4, fixed_abs, tag = 'smem constant byte address 0x4 - core index']
  #allocation1 [shape = 'u32[144,128]{1,0:T(1,128)}', space=vmem, size = 0x12000, scoped, tag = 'internal scratch']
  #allocation2 [shape = 'f32[1,1]{1,0:T(1,128)S(1)}', space=vmem, size = 0x200, scoped, tag = 'scoped memory for tpu_custom_call.1']
  %s0 = inlined_call_operand.vmem [shape: f32[32,256], index: 0, kind: input, shape index: {}]
  %s1 = inlined_call_operand.vmem [shape: f32[64,32], index: 1, kind: input, shape index: {}]
  %s2 = inlined_call_operand.vmem [shape: f32[64,1], index: 2, kind: input, shape index: {}]
  %s3 = inlined_call_operand.vmem [shape: f32[32,64], index: 3, kind: input, shape index: {}]
  %s4 = inlined_call_operand.vmem [shape: f32[32,1], index: 4, kind: input, shape index: {}]
  %s5 = inlined_call_operand.vmem [shape: f32[32,1], index: 5, kind: input, shape index: {}]
  %s6 = inlined_call_operand.<no memory space> [shape: f32[1,1], index: 6, kind: input, shape index: {}]
  %s7 = inlined_call_operand.hbm [shape: f32[1,256], index: 7, kind: output, shape index: {}]
  %s8 = sld [smem:[#allocation0]]
  $region99: #{tpu_custom_call.1} parent=0
    _
  %s10 = ssub.s32 1, %s8
  %s11 = scalar_select 0, %s10, %s8
  %v12 = vstv %s6
  %13 = vst [vmem:[#allocation2] sm:$0x1] %v12
  $region1: #{tpu_custom_call.1} parent=0
    #allocation3 [shape = 'u8[32768]{0}', space=vmem, size = 0x8000, scoped, tag = 'input window, operand 0']
    #allocation4 [shape = 'u8[1024]{0}', space=vmem, size = 0x400, scoped, tag = 'output window, operand 0']
    #allocation5 [shape = 's32[2]{0}', space=sflag, size = 0x8, scoped, tag = 'scoped memory for tpu_custom_call.1']
    %14 = vsyncpa [#allocation5], 0
    %s15 = scalar_lea.sflag [#allocation5], 1
    %16 = vsyncpa %s15, 0
    loop: start=0, step=1, limit=4
    $region2: #{tpu_custom_call.1} parent=1 // loop_pre_header
      _
    $region3: #{tpu_custom_call.1} parent=1 // loop_header
      %s18 = sphi 0, %s22
      %p19 = scmp.ge.s32.totalorder %s18, 4
      %s28 = sphi 0, %s30
      %s31 = sphi 0, %s28
      %s32 = sphi 0, %s31
      %s48 = sphi 0, %s32
      %s52 = sphi 0, %s52
      %s54 = sphi 0, %s52
      %s55 = sphi 0, %s54
      %s69 = sphi 0, %s55
      %s73 = sphi 0, %s73
      %s75 = sphi 0, %s73
      %s76 = sphi 0, %s75
      %s90 = sphi 0, %s76
      %s94 = sphi 0, %s94
      %s96 = sphi 0, %s94
      %s97 = sphi 0, %s96
      %s111 = sphi 0, %s97
      %s115 = sphi 0, %s115
      %s117 = sphi 0, %s115
      %s118 = sphi 0, %s117
      %s132 = sphi 0, %s118
      %s136 = sphi 0, %s136
      %s138 = sphi 0, %s136
      %s139 = sphi 0, %s138
      %s153 = sphi 0, %s139
      %s157 = sphi 0, %s157
      %s159 = sphi 0, %s157
      %s160 = sphi 0, %s159
      %s174 = sphi 0, %s160
      %s180 = sphi 0, %s182
      %s183 = sphi 0, %s180
      %s184 = sphi 0, %s183
      %s200 = sphi 0, %s184
    $region4: #{tpu_custom_call.1} parent=1 // loop_header_branch
      %21 = sbr.rel (%p19) target = $region8
    $region5: #{tpu_custom_call.1} parent=1 // loop_body
      %s23 = ssub.s32 %s18, 1
      %s24 = ssub.s32 %s18, 2
      %s25 = sadd.s32 %s18, 1
      %s26 = ssub.s32 %s18, %s25
      %p27 = scmp.eq.s32.totalorder %s26, 0
      %s29 = sadd.s32 %s28, 1
      %s30 = scalar_select %p27, %s28, %s29
      %p33 = pneg %p27
      %p34 = scmp.eq.s32.totalorder %s18, 1
      %p35 = por %p33, %p34
      %p36 = scmp.ne.s32.totalorder %s28, %s31
      %p37 = scmp.eq.s32.totalorder %s18, 0
      %p38 = por %p36, %p37
      %p39 = scmp.ne.s32.totalorder %s28, %s31
      %p40 = scmp.eq.s32.totalorder %s23, 1
      %p41 = por %p39, %p40
      %p42 = scmp.ne.s32.totalorder %s31, %s32
      %p43 = scmp.eq.s32.totalorder %s23, 0
      %p44 = por %p42, %p43
      %p45 = scmp.ne.s32.totalorder %s31, %s32
      %p46 = scmp.eq.s32.totalorder %s24, 1
      %p47 = por %p45, %p46
      %p49 = scmp.ne.s32.totalorder %s32, %s48
      %p50 = scmp.eq.s32.totalorder %s24, 0
      %p51 = por %p49, %p50
      %s53 = sadd.s32 %s52, 1
      %p56 = scmp.eq.s32.totalorder %s18, 1
      %p57 = scmp.ne.s32.totalorder %s52, %s54
      %p58 = scmp.eq.s32.totalorder %s18, 0
      %p59 = por %p57, %p58
      %p60 = scmp.ne.s32.totalorder %s52, %s54
      %p61 = scmp.eq.s32.totalorder %s23, 1
      %p62 = por %p60, %p61
      %p63 = scmp.ne.s32.totalorder %s54, %s55
      %p64 = scmp.eq.s32.totalorder %s23, 0
      %p65 = por %p63, %p64
      %p66 = scmp.ne.s32.totalorder %s54, %s55
      %p67 = scmp.eq.s32.totalorder %s24, 1
      %p68 = por %p66, %p67
      %p70 = scmp.ne.s32.totalorder %s55, %s69
      %p71 = scmp.eq.s32.totalorder %s24, 0
      %p72 = por %p70, %p71
      %s74 = sadd.s32 %s73, 1
      %p77 = scmp.eq.s32.totalorder %s18, 1
      %p78 = scmp.ne.s32.totalorder %s73, %s75
      %p79 = scmp.eq.s32.totalorder %s18, 0
      %p80 = por %p78, %p79
      %p81 = scmp.ne.s32.totalorder %s73, %s75
      %p82 = scmp.eq.s32.totalorder %s23, 1
      %p83 = por %p81, %p82
      %p84 = scmp.ne.s32.totalorder %s75, %s76
      %p85 = scmp.eq.s32.totalorder %s23, 0
      %p86 = por %p84, %p85
      %p87 = scmp.ne.s32.totalorder %s75, %s76
      %p88 = scmp.eq.s32.totalorder %s24, 1
      %p89 = por %p87, %p88
      %p91 = scmp.ne.s32.totalorder %s76, %s90
      %p92 = scmp.eq.s32.totalorder %s24, 0
      %p93 = por %p91, %p92
      %s95 = sadd.s32 %s94, 1
      %p98 = scmp.eq.s32.totalorder %s18, 1
      %p99 = scmp.ne.s32.totalorder %s94, %s96
      %p100 = scmp.eq.s32.totalorder %s18, 0
      %p101 = por %p99, %p100
      %p102 = scmp.ne.s32.totalorder %s94, %s96
      %p103 = scmp.eq.s32.totalorder %s23, 1
      %p104 = por %p102, %p103
      %p105 = scmp.ne.s32.totalorder %s96, %s97
      %p106 = scmp.eq.s32.totalorder %s23, 0
      %p107 = por %p105, %p106
      %p108 = scmp.ne.s32.totalorder %s96, %s97
      %p109 = scmp.eq.s32.totalorder %s24, 1
      %p110 = por %p108, %p109
      %p112 = scmp.ne.s32.totalorder %s97, %s111
      %p113 = scmp.eq.s32.totalorder %s24, 0
      %p114 = por %p112, %p113
      %s116 = sadd.s32 %s115, 1
      %p119 = scmp.eq.s32.totalorder %s18, 1
      %p120 = scmp.ne.s32.totalorder %s115, %s117
      %p121 = scmp.eq.s32.totalorder %s18, 0
      %p122 = por %p120, %p121
      %p123 = scmp.ne.s32.totalorder %s115, %s117
      %p124 = scmp.eq.s32.totalorder %s23, 1
      %p125 = por %p123, %p124
      %p126 = scmp.ne.s32.totalorder %s117, %s118
      %p127 = scmp.eq.s32.totalorder %s23, 0
      %p128 = por %p126, %p127
      %p129 = scmp.ne.s32.totalorder %s117, %s118
      %p130 = scmp.eq.s32.totalorder %s24, 1
      %p131 = por %p129, %p130
      %p133 = scmp.ne.s32.totalorder %s118, %s132
      %p134 = scmp.eq.s32.totalorder %s24, 0
      %p135 = por %p133, %p134
      %s137 = sadd.s32 %s136, 1
      %p140 = scmp.eq.s32.totalorder %s18, 1
      %p141 = scmp.ne.s32.totalorder %s136, %s138
      %p142 = scmp.eq.s32.totalorder %s18, 0
      %p143 = por %p141, %p142
      %p144 = scmp.ne.s32.totalorder %s136, %s138
      %p145 = scmp.eq.s32.totalorder %s23, 1
      %p146 = por %p144, %p145
      %p147 = scmp.ne.s32.totalorder %s138, %s139
      %p148 = scmp.eq.s32.totalorder %s23, 0
      %p149 = por %p147, %p148
      %p150 = scmp.ne.s32.totalorder %s138, %s139
      %p151 = scmp.eq.s32.totalorder %s24, 1
      %p152 = por %p150, %p151
      %p154 = scmp.ne.s32.totalorder %s139, %s153
      %p155 = scmp.eq.s32.totalorder %s24, 0
      %p156 = por %p154, %p155
      %s158 = sadd.s32 %s157, 1
      %p161 = scmp.eq.s32.totalorder %s18, 1
      %p162 = scmp.ne.s32.totalorder %s157, %s159
      %p163 = scmp.eq.s32.totalorder %s18, 0
      %p164 = por %p162, %p163
      %p165 = scmp.ne.s32.totalorder %s157, %s159
      %p166 = scmp.eq.s32.totalorder %s23, 1
      %p167 = por %p165, %p166
      %p168 = scmp.ne.s32.totalorder %s159, %s160
      %p169 = scmp.eq.s32.totalorder %s23, 0
      %p170 = por %p168, %p169
      %p171 = scmp.ne.s32.totalorder %s159, %s160
      %p172 = scmp.eq.s32.totalorder %s24, 1
      %p173 = por %p171, %p172
      %p175 = scmp.ne.s32.totalorder %s160, %s174
      %p176 = scmp.eq.s32.totalorder %s24, 0
      %p177 = por %p175, %p176
      %s178 = ssub.s32 %s18, %s25
      %p179 = scmp.eq.s32.totalorder %s178, 0
      %s181 = sadd.s32 %s180, 1
      %s182 = scalar_select %p179, %s180, %s181
      %p185 = pneg %p179
      %p186 = scmp.eq.s32.totalorder %s18, 1
      %p187 = por %p185, %p186
      %p188 = scmp.ne.s32.totalorder %s180, %s183
      %p189 = scmp.eq.s32.totalorder %s18, 0
      %p190 = por %p188, %p189
      %p191 = scmp.ne.s32.totalorder %s180, %s183
      %p192 = scmp.eq.s32.totalorder %s23, 1
      %p193 = por %p191, %p192
      %p194 = scmp.ne.s32.totalorder %s183, %s184
      %p195 = scmp.eq.s32.totalorder %s23, 0
      %p196 = por %p194, %p195
      %p197 = scmp.ne.s32.totalorder %s183, %s184
      %p198 = scmp.eq.s32.totalorder %s24, 1
      %p199 = por %p197, %p198
      %p201 = scmp.ne.s32.totalorder %s184, %s200
      %p202 = scmp.eq.s32.totalorder %s24, 0
      %p203 = por %p201, %p202
      %p204 = scmp.le.s32.totalorder 1, %s18
      %p205 = scmp.lt.s32.totalorder %s18, 3
      %p206 = pnand %p204, %p205
      %p207 = pneg %p206
      // Predicated region
      $region9: #{tpu_custom_call.1} parent=5 // pred_check
        _
      $region10: #{tpu_custom_call.1} parent=5 // pred_check_branch
        %209 = sbr.rel (%p206) target = $region12
      $region11: #{tpu_custom_call.1} parent=5 // pred_region
        %s210 = ssub.s32 %s18, 1
        // Predicated region
        $region13: #{tpu_custom_call.1} parent=11 // pred_check
          %p211 = pneg %p65
        $region14: #{tpu_custom_call.1} parent=11 // pred_check_branch
          %213 = sbr.rel (%p211) target = $region16
        $region15: #{tpu_custom_call.1} parent=11 // pred_region
          _
        $region16: #{tpu_custom_call.1} parent=11 // pred_fallthru
          _
        // Predicated region
        $region17: #{tpu_custom_call.1} parent=11 // pred_check
          %p214 = pneg %p86
        $region18: #{tpu_custom_call.1} parent=11 // pred_check_branch
          %216 = sbr.rel (%p214) target = $region20
        $region19: #{tpu_custom_call.1} parent=11 // pred_region
          _
        $region20: #{tpu_custom_call.1} parent=11 // pred_fallthru
          _
        // Predicated region
        $region21: #{tpu_custom_call.1} parent=11 // pred_check
          %p217 = pneg %p107
        $region22: #{tpu_custom_call.1} parent=11 // pred_check_branch
          %219 = sbr.rel (%p217) target = $region24
        $region23: #{tpu_custom_call.1} parent=11 // pred_region
          _
        $region24: #{tpu_custom_call.1} parent=11 // pred_fallthru
          _
        // Predicated region
        $region25: #{tpu_custom_call.1} parent=11 // pred_check
          %p220 = pneg %p128
        $region26: #{tpu_custom_call.1} parent=11 // pred_check_branch
          %222 = sbr.rel (%p220) target = $region28
        $region27: #{tpu_custom_call.1} parent=11 // pred_region
          _
        $region28: #{tpu_custom_call.1} parent=11 // pred_fallthru
          _
        // Predicated region
        $region29: #{tpu_custom_call.1} parent=11 // pred_check
          %p223 = pneg %p149
        $region30: #{tpu_custom_call.1} parent=11 // pred_check_branch
          %225 = sbr.rel (%p223) target = $region32
        $region31: #{tpu_custom_call.1} parent=11 // pred_region
          _
        $region32: #{tpu_custom_call.1} parent=11 // pred_fallthru
          _
        // Predicated region
        $region33: #{tpu_custom_call.1} parent=11 // pred_check
          %p226 = pneg %p170
        $region34: #{tpu_custom_call.1} parent=11 // pred_check_branch
          %228 = sbr.rel (%p226) target = $region36
        $region35: #{tpu_custom_call.1} parent=11 // pred_region
          _
        $region36: #{tpu_custom_call.1} parent=11 // pred_fallthru
          _
      $region12: #{tpu_custom_call.1} parent=5 // pred_fallthru
        _
      %p229 = scmp.lt.s32.totalorder %s18, 2
      // Predicated region
      $region37: #{tpu_custom_call.1} parent=5 // pred_check
        %p230 = pneg %p229
      $region38: #{tpu_custom_call.1} parent=5 // pred_check_branch
        %232 = sbr.rel (%p230) target = $region40
      $region39: #{tpu_custom_call.1} parent=5 // pred_region
        // Predicated region
        $region41: #{tpu_custom_call.1} parent=39 // pred_check
          %p233 = pneg %p38
        $region42: #{tpu_custom_call.1} parent=39 // pred_check_branch
          %235 = sbr.rel (%p233) target = $region44
        $region43: #{tpu_custom_call.1} parent=39 // pred_region
          %s236 = sand.u32 %s28, 1
          %s237 = sand.u32 %s28, 1
          %s238 = smul.addr %s237, 32
          %s239 = scalar_lea.vmem [#allocation3], %s238
          %s240 = smul.addr %s18, 8
          %s241 = scalar_lea.vmem %s0, %s240
          // Predicated region
          $region45: #{tpu_custom_call.1} parent=43 // pred_check
            _
          $region46: #{tpu_custom_call.1} parent=43 // pred_check_branch
            %243 = sbr.rel (0) target = $region48
          $region47: #{tpu_custom_call.1} parent=43 // pred_region
            // Predicated region
            $region49: #{tpu_custom_call.1} parent=47 // pred_check
              _
            $region50: #{tpu_custom_call.1} parent=47 // pred_check_branch
              %245 = sbr.rel (0) target = $region52
            $region51: #{tpu_custom_call.1} parent=47 // pred_region
              // Predicated region
              $region64: #{tpu_custom_call.1} parent=51 // pred_check
                _
              $region65: #{tpu_custom_call.1} parent=51 // pred_check_branch
                %267 = sbr.rel (0) target = $region67
              $region66: #{tpu_custom_call.1} parent=51 // pred_region
                loop: start=0, step=1, limit=1
                $region68: #{tpu_custom_call.1} parent=66 // loop_pre_header
                  _
                $region69: #{tpu_custom_call.1} parent=66 // loop_header
                  %s269 = sphi 0, %s273
                  %p270 = scmp.ge.s32.totalorder %s269, 1
                  %s274 = sphi %s241, %s241
                  %s275 = sphi %s239, %s239
                $region70: #{tpu_custom_call.1} parent=66 // loop_header_branch
                  %272 = sbr.rel (%p270) target = $region74
                $region71: #{tpu_custom_call.1} parent=66 // loop_body
                  %v276 = vld [vmem:[%s274] sm:$0xff]
                  %277 = vst [vmem:[%s275] sm:$0xff] %v276
                  %v278 = vld [vmem:[%s274 + $0x10] sm:$0xff]
                  %279 = vst [vmem:[%s275 + $0x8] sm:$0xff] %v278
                  %v280 = vld [vmem:[%s274 + $0x20] sm:$0xff]
                  %281 = vst [vmem:[%s275 + $0x10] sm:$0xff] %v280
                  %v282 = vld [vmem:[%s274 + $0x30] sm:$0xff]
                  %283 = vst [vmem:[%s275 + $0x18] sm:$0xff] %v282
                $region72: #{tpu_custom_call.1} parent=66 // loop_footer
                  %s273 = sadd.s32 1, %s269
                $region73: #{tpu_custom_call.1} parent=66 // loop_footer_branch
                  %268 = sbr.rel target = $region69
                $region74: #{tpu_custom_call.1} parent=66 // loop_exit
                  _
              $region67: #{tpu_custom_call.1} parent=51 // pred_fallthru
                _
              // Predicated region
              $region75: #{tpu_custom_call.1} parent=51 // pred_check
                _
              $region76: #{tpu_custom_call.1} parent=51 // pred_check_branch
                %285 = sbr.rel target = $region78
              $region77: #{tpu_custom_call.1} parent=51 // pred_region
                _
              $region78: #{tpu_custom_call.1} parent=51 // pred_fallthru
                _
            $region52: #{tpu_custom_call.1} parent=47 // pred_fallthru
              _
            // Predicated region
            $region53: #{tpu_custom_call.1} parent=47 // pred_check
              _
            $region54: #{tpu_custom_call.1} parent=47 // pred_check_branch
              %247 = sbr.rel target = $region56
            $region55: #{tpu_custom_call.1} parent=47 // pred_region
              %s249 = ssub.s32 256, 1
              loop: start=0, step=1, limit=1
              $region57: #{tpu_custom_call.1} parent=55 // loop_pre_header
                _
              $region58: #{tpu_custom_call.1} parent=55 // loop_header
                %s251 = sphi 0, %s255
                %p252 = scmp.ge.s32.totalorder %s251, 1
                %s256 = sphi %s241, %s241
                %s257 = sphi %s239, %s239
              $region59: #{tpu_custom_call.1} parent=55 // loop_header_branch
                %254 = sbr.rel (%p252) target = $region63
              $region60: #{tpu_custom_call.1} parent=55 // loop_body
                %v258 = vld [vmem:[%s256] sm:%s249]
                %259 = vst [vmem:[%s257] sm:%s249] %v258
                %v260 = vld [vmem:[%s256 + $0x10] sm:%s249]
                %261 = vst [vmem:[%s257 + $0x8] sm:%s249] %v260
                %v262 = vld [vmem:[%s256 + $0x20] sm:%s249]
                %263 = vst [vmem:[%s257 + $0x10] sm:%s249] %v262
                %v264 = vld [vmem:[%s256 + $0x30] sm:%s249]
                %265 = vst [vmem:[%s257 + $0x18] sm:%s249] %v264
              $region61: #{tpu_custom_call.1} parent=55 // loop_footer
                %s255 = sadd.s32 1, %s251
              $region62: #{tpu_custom_call.1} parent=55 // loop_footer_branch
                %250 = sbr.rel target = $region58
              $region63: #{tpu_custom_call.1} parent=55 // loop_exit
                _
            $region56: #{tpu_custom_call.1} parent=47 // pred_fallthru
              _
          $region48: #{tpu_custom_call.1} parent=43 // pred_fallthru
            _
          %286 = vnop
        $region44: #{tpu_custom_call.1} parent=39 // pred_fallthru
          _
      $region40: #{tpu_custom_call.1} parent=5 // pred_fallthru
        _
      %p287 = scmp.le.s32.totalorder 1, %s18
      %p288 = scmp.lt.s32.totalorder %s18, 3
      %p289 = pnand %p287, %p288
      %p290 = pneg %p289
      // Predicated region
      $region79: #{tpu_custom_call.1} parent=5 // pred_check
        _
      $region80: #{tpu_custom_call.1} parent=5 // pred_check_branch
        %292 = sbr.rel (%p289) target = $region82
      $region81: #{tpu_custom_call.1} parent=5 // pred_region
        %s293 = ssub.s32 %s18, 1
        %s294 = sand.u32 %s31, 1
        %s295 = sand.u32 %s31, 1
        %s296 = smul.addr %s295, 32
        %s297 = scalar_lea.vmem [#allocation3], %s296
        // Predicated region
        $region83: #{tpu_custom_call.1} parent=81 // pred_check
          %p298 = pneg %p44
        $region84: #{tpu_custom_call.1} parent=81 // pred_check_branch
          %300 = sbr.rel (%p298) target = $region86
        $region85: #{tpu_custom_call.1} parent=81 // pred_region
          _
        $region86: #{tpu_custom_call.1} parent=81 // pred_fallthru
          _
        %s301 = sand.u32 %s31, 1
        %s302 = sand.u32 %s31, 1
        %s303 = smul.addr %s302, 32
        %s304 = scalar_lea.vmem [#allocation3], %s303
        %p305 = pneg %p44
        %p306 = pneg %p41
        %p307 = pneg %p65
        %p308 = pneg %p62
        %p309 = pneg %p86
        %p310 = pneg %p83
        %p311 = pneg %p107
        %p312 = pneg %p104
        %p313 = pneg %p128
        %p314 = pneg %p125
        %p315 = pneg %p149
        %p316 = pneg %p146
        %p317 = pneg %p170
        %p318 = pneg %p167
        %p319 = pneg %p196
        %p320 = pneg %p193
        %s321 = sand.u32 %s183, 1
        %s322 = scalar_lea.sflag [#allocation5], %s321
        %s323 = sand.u32 %s183, 1
        %s324 = scalar_lea.vmem [#allocation4], %s323
        %v325 = vld [vmem:[%s297] sm:$0xff]
        %v326 = vld [vmem:[%s297 + $0x8] sm:$0xff]
        %v327 = vld [vmem:[%s297 + $0x10] sm:$0xff]
        %v328 = vld [vmem:[%s297 + $0x18] sm:$0xff]
        %v329 = vld [vmem:[%s1] sm:$0xff]
        %v330 = vld [vmem:[%s1 + $0x8] sm:$0xff]
        %v331 = vld [vmem:[%s1 + $0x10] sm:$0xff]
        %v332 = vld [vmem:[%s1 + $0x18] sm:$0xff]
        %v333 = vld [vmem:[%s1 + $0x20] sm:$0xff]
        %v334 = vld [vmem:[%s1 + $0x28] sm:$0xff]
        %v335 = vld [vmem:[%s1 + $0x30] sm:$0xff]
        %v336 = vld [vmem:[%s1 + $0x38] sm:$0xff]
        %v337 = vld [vmem:[%s2] sm:$0xff]
        %v338 = vld [vmem:[%s2 + $0x8] sm:$0xff]
        %v339 = vld [vmem:[%s2 + $0x10] sm:$0xff]
        %v340 = vld [vmem:[%s2 + $0x18] sm:$0xff]
        %v341 = vld [vmem:[%s2 + $0x20] sm:$0xff]
        %v342 = vld [vmem:[%s2 + $0x28] sm:$0xff]
        %v343 = vld [vmem:[%s2 + $0x30] sm:$0xff]
        %v344 = vld [vmem:[%s2 + $0x38] sm:$0xff]
        %346 = vset.pattern.permute.xlu0 0
        %347 = vperm.xlu0 %346, %v337
        %v348 = vpop.permute.xlu0 %347
        %351 = vset.pattern.permute.xlu0 0
        %352 = vperm.xlu0 %351, %v338
        %v353 = vpop.permute.xlu0 %352
        %356 = vset.pattern.permute.xlu0 0
        %357 = vperm.xlu0 %356, %v339
        %v358 = vpop.permute.xlu0 %357
        %361 = vset.pattern.permute.xlu0 0
        %362 = vperm.xlu0 %361, %v340
        %v363 = vpop.permute.xlu0 %362
        %366 = vset.pattern.permute.xlu0 0
        %367 = vperm.xlu0 %366, %v341
        %v368 = vpop.permute.xlu0 %367
        %371 = vset.pattern.permute.xlu0 0
        %372 = vperm.xlu0 %371, %v342
        %v373 = vpop.permute.xlu0 %372
        %376 = vset.pattern.permute.xlu0 0
        %377 = vperm.xlu0 %376, %v343
        %v378 = vpop.permute.xlu0 %377
        %381 = vset.pattern.permute.xlu0 0
        %382 = vperm.xlu0 %381, %v344
        %v383 = vpop.permute.xlu0 %382
        %vm385 = vcmask 261120
        %v387 = vsel %vm385, %v329, 0
        %v390 = vsel %vm385, %v330, 0
        %v393 = vsel %vm385, %v331, 0
        %v396 = vsel %vm385, %v332, 0
        %v399 = vsel %vm385, %v333, 0
        %v402 = vsel %vm385, %v334, 0
        %v405 = vsel %vm385, %v335, 0
        %v408 = vsel %vm385, %v336, 0
        %410 = vmatprep.subr.mxu0 0.0
        %411 = vmatpush1.msra.mxu0 0.0
        %412 = vmatprep.subr.mxu0 0.0
        %413 = vmatpush1.msra.mxu0 0.0
        %414 = vmatprep.subr.mxu0 0.0
        %415 = vmatpush1.msra.mxu0 0.0
        %416 = vmatprep.subr.mxu0 0.0
        %417 = vmatpush1.msra.mxu0 0.0
        %418 = vmatprep.subr.mxu0 0.0
        %419 = vmatpush1.msra.mxu0 0.0
        %420 = vmatprep.subr.mxu0 0.0
        %421 = vmatpush1.msra.mxu0 0.0
        %422 = vmatprep.subr.mxu0 0.0
        %423 = vmatpush1.msra.mxu0 0.0
        %424 = vmatprep.subr.mxu0 0.0
        %425 = vmatpush1.msra.mxu0 0.0
        %426 = vmatprep.subr.mxu0 0.0
        %427 = vmatpush1.msra.mxu0 0.0
        %428 = vmatprep.subr.mxu0 0.0
        %429 = vmatpush1.msra.mxu0 0.0
        %430 = vmatprep.subr.mxu0 0.0
        %431 = vmatpush1.msra.mxu0 0.0
        %432 = vmatprep.subr.mxu0 0.0
        %433 = vmatpush1.msra.mxu0 0.0
        %434 = vmatprep.subr.mxu0 0.0
        %435 = vmatpush1.msra.mxu0 %v328
        %436 = vmatprep.subr.mxu0 0.0
        %437 = vmatpush1.msra.mxu0 %v327
        %438 = vmatprep.subr.mxu0 0.0
        %439 = vmatpush1.msra.mxu0 %v326
        %440 = vmatprep.subr.mxu0 0.0
        %441 = vmatpush1.msra.mxu0 %v325
        %442 = vmatprep.subr.mxu0 0.0
        %443 = vmatpush2.msra.mxu0 0.0
        %444 = vmatprep.subr.mxu0 0.0
        %445 = vmatpush2.msra.mxu0 0.0
        %446 = vmatprep.subr.mxu0 0.0
        %447 = vmatpush2.msra.mxu0 0.0
        %448 = vmatprep.subr.mxu0 0.0
        %449 = vmatpush2.msra.mxu0 0.0
        %450 = vmatprep.subr.mxu0 0.0
        %451 = vmatpush2.msra.mxu0 0.0
        %452 = vmatprep.subr.mxu0 0.0
        %453 = vmatpush2.msra.mxu0 0.0
        %454 = vmatprep.subr.mxu0 0.0
        %455 = vmatpush2.msra.mxu0 0.0
        %456 = vmatprep.subr.mxu0 0.0
        %457 = vmatpush2.msra.mxu0 0.0
        %458 = vmatprep.subr.mxu0 0.0
        %459 = vmatpush2.msra.mxu0 0.0
        %460 = vmatprep.subr.mxu0 0.0
        %461 = vmatpush2.msra.mxu0 0.0
        %462 = vmatprep.subr.mxu0 0.0
        %463 = vmatpush2.msra.mxu0 0.0
        %464 = vmatprep.subr.mxu0 0.0
        %465 = vmatpush2.msra.mxu0 0.0
        %466 = vmatprep.subr.mxu0 0.0
        %467 = vmatpush2.msra.mxu0 0.0
        %468 = vmatprep.subr.mxu0 0.0
        %469 = vmatpush2.msra.mxu0 0.0
        %470 = vmatprep.subr.mxu0 0.0
        %471 = vmatpush2.msra.mxu0 0.0
        %472 = vmatprep.subr.mxu0 0.0
        %473 = vmatpush2.msra.mxu0 0.0
        %474 = vmatprep.mubr.f32.mxu0 0.0
        %475 = vmatmul.mubr.f32.gmra.mxu0 %v387
        %v476 = vpop.f32.mrf.mxu0
        %v477 = vadd.f32 %v348, %v476
        %v478 = vpop.f32.mrf.mxu0
        %479 = vmatprep.mubr.f32.mxu0 0.0
        %480 = vmatmul.mubr.f32.gmra.mxu0 %v390
        %v481 = vpop.f32.mrf.mxu0
        %v482 = vadd.f32 %v353, %v481
        %v483 = vpop.f32.mrf.mxu0
        %484 = vmatprep.mubr.f32.mxu0 0.0
        %485 = vmatmul.mubr.f32.gmra.mxu0 %v393
        %v486 = vpop.f32.mrf.mxu0
        %v487 = vadd.f32 %v358, %v486
        %v488 = vpop.f32.mrf.mxu0
        %489 = vmatprep.mubr.f32.mxu0 0.0
        %490 = vmatmul.mubr.f32.gmra.mxu0 %v396
        %v491 = vpop.f32.mrf.mxu0
        %v492 = vadd.f32 %v363, %v491
        %v493 = vpop.f32.mrf.mxu0
        %494 = vmatprep.mubr.f32.mxu0 0.0
        %495 = vmatmul.mubr.f32.gmra.mxu0 %v399
        %v496 = vpop.f32.mrf.mxu0
        %v497 = vadd.f32 %v368, %v496
        %v498 = vpop.f32.mrf.mxu0
        %499 = vmatprep.mubr.f32.mxu0 0.0
        %500 = vmatmul.mubr.f32.gmra.mxu0 %v402
        %v501 = vpop.f32.mrf.mxu0
        %v502 = vadd.f32 %v373, %v501
        %v503 = vpop.f32.mrf.mxu0
        %504 = vmatprep.mubr.f32.mxu0 0.0
        %505 = vmatmul.mubr.f32.gmra.mxu0 %v405
        %v506 = vpop.f32.mrf.mxu0
        %v507 = vadd.f32 %v378, %v506
        %v508 = vpop.f32.mrf.mxu0
        %509 = vmatprep.mubr.f32.mxu0 0.0
        %510 = vmatmul.mubr.f32.gmra.mxu0 %v408
        %v511 = vpop.f32.mrf.mxu0
        %v512 = vadd.f32 %v383, %v511
        %v513 = vpop.f32.mrf.mxu0
        %514 = vdwg.mxu0
        %v515 = vmax.f32 %v477, 0.0
        %v516 = vmax.f32 %v482, 0.0
        %v517 = vmax.f32 %v487, 0.0
        %v518 = vmax.f32 %v492, 0.0
        %v519 = vmax.f32 %v497, 0.0
        %v520 = vmax.f32 %v502, 0.0
        %v521 = vmax.f32 %v507, 0.0
        %v522 = vmax.f32 %v512, 0.0
        %v523 = vld [vmem:[%s3] sm:$0xff]
        %v524 = vld [vmem:[%s3 + $0x8] sm:$0xff]
        %v525 = vld [vmem:[%s3 + $0x10] sm:$0xff]
        %v526 = vld [vmem:[%s3 + $0x18] sm:$0xff]
        %v527 = vld [vmem:[%s4] sm:$0xff]
        %v528 = vld [vmem:[%s4 + $0x8] sm:$0xff]
        %v529 = vld [vmem:[%s4 + $0x10] sm:$0xff]
        %v530 = vld [vmem:[%s4 + $0x18] sm:$0xff]
        %532 = vset.pattern.permute.xlu0 0
        %533 = vperm.xlu0 %532, %v527
        %v534 = vpop.permute.xlu0 %533
        %537 = vset.pattern.permute.xlu0 0
        %538 = vperm.xlu0 %537, %v528
        %v539 = vpop.permute.xlu0 %538
        %542 = vset.pattern.permute.xlu0 0
        %543 = vperm.xlu0 %542, %v529
        %v544 = vpop.permute.xlu0 %543
        %547 = vset.pattern.permute.xlu0 0
        %548 = vperm.xlu0 %547, %v530
        %v549 = vpop.permute.xlu0 %548
        %vm551 = vcmask 523264
        %v553 = vsel %vm551, %v523, 0
        %v556 = vsel %vm551, %v524, 0
        %v559 = vsel %vm551, %v525, 0
        %v562 = vsel %vm551, %v526, 0
        %564 = vmatprep.subr.mxu0 0.0
        %565 = vmatpush1.msra.mxu0 0.0
        %566 = vmatprep.subr.mxu0 0.0
        %567 = vmatpush1.msra.mxu0 0.0
        %568 = vmatprep.subr.mxu0 0.0
        %569 = vmatpush1.msra.mxu0 0.0
        %570 = vmatprep.subr.mxu0 0.0
        %571 = vmatpush1.msra.mxu0 0.0
        %572 = vmatprep.subr.mxu0 0.0
        %573 = vmatpush1.msra.mxu0 0.0
        %574 = vmatprep.subr.mxu0 0.0
        %575 = vmatpush1.msra.mxu0 0.0
        %576 = vmatprep.subr.mxu0 0.0
        %577 = vmatpush1.msra.mxu0 0.0
        %578 = vmatprep.subr.mxu0 0.0
        %579 = vmatpush1.msra.mxu0 0.0
        %580 = vmatprep.subr.mxu0 0.0
        %581 = vmatpush1.msra.mxu0 %v522
        %582 = vmatprep.subr.mxu0 0.0
        %583 = vmatpush1.msra.mxu0 %v521
        %584 = vmatprep.subr.mxu0 0.0
        %585 = vmatpush1.msra.mxu0 %v520
        %586 = vmatprep.subr.mxu0 0.0
        %587 = vmatpush1.msra.mxu0 %v519
        %588 = vmatprep.subr.mxu0 0.0
        %589 = vmatpush1.msra.mxu0 %v518
        %590 = vmatprep.subr.mxu0 0.0
        %591 = vmatpush1.msra.mxu0 %v517
        %592 = vmatprep.subr.mxu0 0.0
        %593 = vmatpush1.msra.mxu0 %v516
        %594 = vmatprep.subr.mxu0 0.0
        %595 = vmatpush1.msra.mxu0 %v515
        %596 = vmatprep.subr.mxu0 0.0
        %597 = vmatpush2.msra.mxu0 0.0
        %598 = vmatprep.subr.mxu0 0.0
        %599 = vmatpush2.msra.mxu0 0.0
        %600 = vmatprep.subr.mxu0 0.0
        %601 = vmatpush2.msra.mxu0 0.0
        %602 = vmatprep.subr.mxu0 0.0
        %603 = vmatpush2.msra.mxu0 0.0
        %604 = vmatprep.subr.mxu0 0.0
        %605 = vmatpush2.msra.mxu0 0.0
        %606 = vmatprep.subr.mxu0 0.0
        %607 = vmatpush2.msra.mxu0 0.0
        %608 = vmatprep.subr.mxu0 0.0
        %609 = vmatpush2.msra.mxu0 0.0
        %610 = vmatprep.subr.mxu0 0.0
        %611 = vmatpush2.msra.mxu0 0.0
        %612 = vmatprep.subr.mxu0 0.0
        %613 = vmatpush2.msra.mxu0 0.0
        %614 = vmatprep.subr.mxu0 0.0
        %615 = vmatpush2.msra.mxu0 0.0
        %616 = vmatprep.subr.mxu0 0.0
        %617 = vmatpush2.msra.mxu0 0.0
        %618 = vmatprep.subr.mxu0 0.0
        %619 = vmatpush2.msra.mxu0 0.0
        %620 = vmatprep.subr.mxu0 0.0
        %621 = vmatpush2.msra.mxu0 0.0
        %622 = vmatprep.subr.mxu0 0.0
        %623 = vmatpush2.msra.mxu0 0.0
        %624 = vmatprep.subr.mxu0 0.0
        %625 = vmatpush2.msra.mxu0 0.0
        %626 = vmatprep.subr.mxu0 0.0
        %627 = vmatpush2.msra.mxu0 0.0
        %628 = vmatprep.mubr.f32.mxu0 0.0
        %629 = vmatmul.mubr.f32.gmra.mxu0 %v553
        %v630 = vpop.f32.mrf.mxu0
        %v631 = vadd.f32 %v534, %v630
        %v632 = vpop.f32.mrf.mxu0
        %633 = vmatprep.mubr.f32.mxu0 0.0
        %634 = vmatmul.mubr.f32.gmra.mxu0 %v556
        %v635 = vpop.f32.mrf.mxu0
        %v636 = vadd.f32 %v539, %v635
        %v637 = vpop.f32.mrf.mxu0
        %638 = vmatprep.mubr.f32.mxu0 0.0
        %639 = vmatmul.mubr.f32.gmra.mxu0 %v559
        %v640 = vpop.f32.mrf.mxu0
        %v641 = vadd.f32 %v544, %v640
        %v642 = vpop.f32.mrf.mxu0
        %643 = vmatprep.mubr.f32.mxu0 0.0
        %644 = vmatmul.mubr.f32.gmra.mxu0 %v562
        %v645 = vpop.f32.mrf.mxu0
        %v646 = vadd.f32 %v549, %v645
        %v647 = vpop.f32.mrf.mxu0
        %648 = vdwg.mxu0
        %v649 = vmax.f32 %v631, 0.0
        %v650 = vmax.f32 %v636, 0.0
        %v651 = vmax.f32 %v641, 0.0
        %v652 = vmax.f32 %v646, 0.0
        %v653 = vld [vmem:[%s5] sm:$0xff]
        %v654 = vld [vmem:[%s5 + $0x8] sm:$0xff]
        %v655 = vld [vmem:[%s5 + $0x10] sm:$0xff]
        %v656 = vld [vmem:[%s5 + $0x18] sm:$0xff]
        %658 = vset.pattern.permute.xlu0 0
        %659 = vperm.xlu0 %658, %v653
        %v660 = vpop.permute.xlu0 %659
        %663 = vset.pattern.permute.xlu0 0
        %664 = vperm.xlu0 %663, %v654
        %v665 = vpop.permute.xlu0 %664
        %668 = vset.pattern.permute.xlu0 0
        %669 = vperm.xlu0 %668, %v655
        %v670 = vpop.permute.xlu0 %669
        %673 = vset.pattern.permute.xlu0 0
        %674 = vperm.xlu0 %673, %v656
        %v675 = vpop.permute.xlu0 %674
        %v677 = vmul.f32 %v649, %v660
        %v678 = vmul.f32 %v650, %v665
        %v679 = vmul.f32 %v651, %v670
        %v680 = vmul.f32 %v652, %v675
        %v681 = vadd.f32 %v677, %v678
        %v682 = vadd.f32 %v681, %v679
        %v683 = vadd.f32 %v682, %v680
        %v684 = vrot.slane %v683, 4
        %v685 = vadd.f32 %v683, %v684
        %v686 = vrot.slane %v685, 2
        %v687 = vadd.f32 %v685, %v686
        %v688 = vrot.slane %v687, 1
        %v689 = vadd.f32 %v687, %v688
        %v690 = vld [vmem:[#allocation2] sm:$0x1]
        %692 = vset.pattern.permute.xlu0 0
        %693 = vperm.xlu0 %692, %v690
        %v694 = vpop.permute.xlu0 %693
        %v696 = vlaneseq
        %v697 = vshrl.u32 %v696, 7
        %v698 = vsub.s32 0, %v697
        %v699 = vrot.slane %v694, %v698
        %v700 = vadd.f32 %v689, %v699
        %701 = vst [vmem:[%s324] sm:$0x1] %v700
        %s702 = sand.u32 %s183, 1
        %s703 = scalar_lea.sflag [#allocation5], %s702
        %s704 = sand.u32 %s183, 1
        %s705 = scalar_lea.vmem [#allocation4], %s704
        // Predicated region
        $region87: #{tpu_custom_call.1} parent=81 // pred_check
          %p706 = pneg %p193
        $region88: #{tpu_custom_call.1} parent=81 // pred_check_branch
          %708 = sbr.rel (%p706) target = $region90
        $region89: #{tpu_custom_call.1} parent=81 // pred_region
          %s710 = ssub.s32 16, 16
          %711 = vsyncadd %s703, %s710
          %s712 = smul.addr %s23, 16
          %s713 = scalar_lea.hbm %s7, %s712
          %s715 = sshll.u32 %s705, 4
          %s716 = int_to_ptr.vmem [resolvable:$true] %s715
          %718 = dma.vmem_to_hbm [thread:$0]  %s716, 16, %s713, %s703
        $region90: #{tpu_custom_call.1} parent=81 // pred_fallthru
          _
      $region82: #{tpu_custom_call.1} parent=5 // pred_fallthru
        _
      %p719 = scmp.le.s32.totalorder 2, %s18
      // Predicated region
      $region91: #{tpu_custom_call.1} parent=5 // pred_check
        %p720 = pneg %p719
      $region92: #{tpu_custom_call.1} parent=5 // pred_check_branch
        %722 = sbr.rel (%p720) target = $region94
      $region93: #{tpu_custom_call.1} parent=5 // pred_region
        %s723 = ssub.s32 %s18, 2
        // Predicated region
        $region95: #{tpu_custom_call.1} parent=93 // pred_check
          %p724 = pneg %p199
        $region96: #{tpu_custom_call.1} parent=93 // pred_check_branch
          %726 = sbr.rel (%p724) target = $region98
        $region97: #{tpu_custom_call.1} parent=93 // pred_region
          %s727 = sand.u32 %s184, 1
          %s728 = scalar_lea.sflag [#allocation5], %s727
          %s729 = sand.u32 %s184, 1
          %s730 = scalar_lea.vmem [#allocation4], %s729
          %731 = dma.done %s728, 16
        $region98: #{tpu_custom_call.1} parent=93 // pred_fallthru
          _
      $region94: #{tpu_custom_call.1} parent=5 // pred_fallthru
        _
    $region6: #{tpu_custom_call.1} parent=1 // loop_footer
      %s22 = sadd.s32 1, %s18
    $region7: #{tpu_custom_call.1} parent=1 // loop_footer_branch
      %17 = sbr.rel target = $region3
    $region8: #{tpu_custom_call.1} parent=1 // loop_exit
      _
    %732 = vsyncpa [#allocation5], 1
    %s733 = scalar_lea.sflag [#allocation5], 1
    %734 = vsyncpa %s733, 1

</llo_original>
